<compile_context>
chip_gen: v7x
topology: tpu7x:2x2x1
jax: 0.10.0
libtpu: 0.0.40
codegen_flags: <defaults>
</compile_context>

<pallas_src>
import functools

import numpy as np
import jax
import jax.numpy as jnp
from jax.experimental import pallas as pl
from jax.experimental.pallas import tpu as pltpu


def gen_gaussian_kernel(k_size: int = 5, sigma: float = 1.0) -> np.ndarray:
    """Same formula as init_gaussian_filter._gen_gaussian_kernel (2-D, unnormalized)."""
    center = k_size // 2
    x, y = np.mgrid[0 - center:k_size - center, 0 - center:k_size - center]
    g = (1.0 / (2.0 * np.pi * sigma)
         * np.exp(-(np.square(x) + np.square(y)) / (2.0 * np.square(sigma))))
    return g.astype(np.float32)


def _band_matrices(H: int, W: int, k_size: int, sigma: float):
    """Banded-Toeplitz factors:  A_v @ s @ A_h == conv2d(s, g, 'same', zero pad).

    g(x, y) = 1/(2*pi*sigma) * exp(-(x^2+y^2)/(2 sigma^2)) = gv(x) * gh(y), so the
    2-D 'same' convolution factors exactly into two banded matmuls with the zero
    padding baked into the band matrices.
    """
    center = k_size // 2
    off = np.arange(k_size, dtype=np.float64) - center
    e = np.exp(-np.square(off) / (2.0 * sigma * sigma))
    gv = e                                   # vertical (row) taps
    gh = e / (2.0 * np.pi * sigma)           # horizontal (col) taps, scale folded in

    a_v = np.zeros((H, H), dtype=np.float64)
    a_h = np.zeros((W, W), dtype=np.float64)
    for d in range(k_size):
        delta = d - center
        # v[i, :]    = sum_d gv[d] * s[i + delta, :]   ->  A_v[i, i + delta] = gv[d]
        a_v += gv[d] * np.eye(H, H, k=delta)
        # conf[:, j] = sum_d gh[d] * v[:, j + delta]   ->  A_h[j + delta, j] = gh[d]
        a_h += gh[d] * np.eye(W, W, k=-delta)
    return a_v.astype(np.float32), a_h.astype(np.float32)


# ------------------------------- kernels -----------------------------------

def _fusion_mask_smooth_kernel(av_ref, ah_ref, cur_ref, hist_ref, o_ref, *,
                               n_hist, threshold):
    # av_ref: (H, H), ah_ref: (W, W) -- VMEM-resident band matrices (constant blocks)
    # cur_ref: (1, H, W), hist_ref: (N_hist, H, W), o_ref: (N_hist + 1, H, W)
    a_v = av_ref[...]
    a_h = ah_ref[...]

    def one_map(x_hw):
        s = jax.nn.sigmoid(x_hw.astype(jnp.float32))                   # EUP exp
        v = jnp.dot(a_v, s, preferred_element_type=jnp.float32)        # MXU: vertical blur
        conf = jnp.dot(v, a_h, preferred_element_type=jnp.float32)     # MXU: horizontal blur
        return jnp.where(conf > threshold, 1.0, 0.0).astype(o_ref.dtype)

    o_ref[0] = one_map(cur_ref[0])
    for i in range(n_hist):                  # static unroll; N_hist is small
        o_ref[i + 1] = one_map(hist_ref[i])


def _fusion_mask_nosmooth_kernel(cur_ref, hist_ref, o_ref, *, thr_logit, threshold):
    # sigmoid(x) > t  <=>  x > log(t/(1-t))  for t in (0, 1): one compare, no exp.
    def one(x):
        x = x.astype(jnp.float32)
        if thr_logit is not None:
            cond = x > thr_logit
        else:                                # degenerate threshold outside (0, 1)
            cond = jax.nn.sigmoid(x) > threshold
        return jnp.where(cond, 1.0, 0.0).astype(o_ref.dtype)

    o_ref[0:1] = one(cur_ref[...])
    o_ref[1:] = one(hist_ref[...])


# ------------------------------- wrapper ------------------------------------

def fusion_mask(current_confidence_map, history_confidence_maps, *,
                confidence_threshold: float, k_size: int = 5,
                c_sigma: float = 1.0, smooth: bool = True,
                out_dtype=jnp.float32):
    """JAX/Pallas equivalent of FusionMask.forward.

    current_confidence_map : (B, 1, H, W)
    history_confidence_maps: (B, N_hist, 1, H, W)
    returns                : (B*(N_hist+1), 1, H, W) {0., 1.} mask in `out_dtype`.
                             float32 by default (parity with the module); pass
                             bfloat16 to halve output HBM traffic on BW-bound chips.
    """
    B, _, H, W = current_confidence_map.shape
    N_hist = history_confidence_maps.shape[1]
    N = N_hist + 1

    # Free reshapes (drop the singleton channel dims); no HBM concat / cast pass.
    cur = current_confidence_map.reshape(B, 1, H, W)
    hist = history_confidence_maps.reshape(B, N_hist, H, W)

    # Explicit VMEM budget: double-buffered in/out blocks + band matrices + headroom
    # for the handful of (H, W) f32 temporaries live per map.
    band_bytes = 4 * (H * H + W * W) if smooth else 0
    in_bytes = 4 * N * H * W
    out_bytes = np.dtype(out_dtype).itemsize * N * H * W
    est = 2 * (in_bytes + out_bytes + band_bytes) + 16 * 4 * H * W + (4 << 20)
    vmem_limit = int(min(max(est, 32 << 20), 64 << 20))   # 64 MiB = v7x physical ceiling

    compiler_params = pltpu.CompilerParams(
        dimension_semantics=("parallel",),
        vmem_limit_bytes=vmem_limit)

    cur_spec = pl.BlockSpec((None, 1, H, W), lambda b: (b, 0, 0, 0))
    hist_spec = pl.BlockSpec((None, N_hist, H, W), lambda b: (b, 0, 0, 0))
    out_spec = pl.BlockSpec((None, N, H, W), lambda b: (b, 0, 0, 0))
    out_shape = jax.ShapeDtypeStruct((B, N, H, W), out_dtype)

    if smooth:
        a_v, a_h = _band_matrices(H, W, k_size, c_sigma)
        kernel_fn = functools.partial(
            _fusion_mask_smooth_kernel, n_hist=N_hist,
            threshold=float(confidence_threshold))
        out = pl.pallas_call(
            kernel_fn,
            out_shape=out_shape,
            grid=(B,),
            in_specs=[
                pl.BlockSpec((H, H), lambda b: (0, 0)),   # A_v: constant block, re-used
                pl.BlockSpec((W, W), lambda b: (0, 0)),   # A_h: constant block, re-used
                cur_spec,
                hist_spec,
            ],
            out_specs=out_spec,
            compiler_params=compiler_params,
        )(jnp.asarray(a_v), jnp.asarray(a_h), cur, hist)
    else:
        t = float(confidence_threshold)
        thr_logit = float(np.log(t / (1.0 - t))) if 0.0 < t < 1.0 else None
        kernel_fn = functools.partial(
            _fusion_mask_nosmooth_kernel, thr_logit=thr_logit, threshold=t)
        out = pl.pallas_call(
            kernel_fn,
            out_shape=out_shape,
            grid=(B,),
            in_specs=[cur_spec, hist_spec],
            out_specs=out_spec,
            compiler_params=compiler_params,
        )(cur, hist)

    return out.reshape(B * N, 1, H, W)


# ----------------------------- reference & checks ---------------------------

def _conf_conv2d_ref(x_bnhw, k, sigma):
    """Semantic reference: sigmoid -> true 2-D 'same' conv (== nn.Conv2d, zero bias)."""
    B, N, H, W = x_bnhw.shape
    s = jax.nn.sigmoid(x_bnhw.astype(jnp.float32)).reshape(B * N, 1, H, W)
    g = jnp.asarray(gen_gaussian_kernel(k, sigma)).reshape(1, 1, k, k)
    p = (k - 1) // 2
    out = jax.lax.conv_general_dilated(
        s, g, window_strides=(1, 1), padding=((p, p), (p, p)),
        dimension_numbers=('NCHW', 'OIHW', 'NCHW'),
        precision=jax.lax.Precision.HIGHEST)
    return out.reshape(B, N, H, W)


def _run_checks(B, N_hist, H, W, seed, *, threshold=0.5, k_size=5, c_sigma=1.0):
    N = N_hist + 1
    k1, k2 = jax.random.split(jax.random.PRNGKey(seed))
    current = 2.0 * jax.random.normal(k1, (B, 1, H, W), jnp.float32)
    history = 2.0 * jax.random.normal(k2, (B, N_hist, 1, H, W), jnp.float32)

    # --- smoothed path (gaussian_smooth != None) ---
    out = fusion_mask(current, history, confidence_threshold=threshold,
                      k_size=k_size, c_sigma=c_sigma, smooth=True)
    out = jax.block_until_ready(out)
    assert out.shape == (B * N, 1, H, W), out.shape

    conf_all = jnp.concatenate([current[:, None], history], axis=1).reshape(B, N, H, W)
    conf_ref = np.asarray(_conf_conv2d_ref(conf_all, k_size, c_sigma))
    mask_ref = (conf_ref > threshold).astype(np.float32)
    out_np = np.asarray(out).reshape(B, N, H, W)
    near = np.abs(conf_ref - threshold) < 5e-3        # MXU f32 rounding tolerance band
    mismatch = (out_np != mask_ref) & (~near)
    assert not mismatch.any(), f"{int(mismatch.sum())} smoothed-mask mismatches"
    assert set(np.unique(out_np)).issubset({0.0, 1.0})

    # --- smooth=False path (gaussian_smooth=None) ---
    out_ns = fusion_mask(current, history, confidence_threshold=threshold, smooth=False)
    out_ns = jax.block_until_ready(out_ns)
    conf_ns = np.asarray(jax.nn.sigmoid(conf_all))
    mask_ns = (conf_ns > threshold).astype(np.float32)
    near_ns = np.abs(conf_ns - threshold) < 1e-6
    mism_ns = (np.asarray(out_ns).reshape(B, N, H, W) != mask_ns) & (~near_ns)
    assert not mism_ns.any(), f"{int(mism_ns.sum())} no-smooth mask mismatches"


if __name__ == "__main__":
    # Small shapes consistent with the module's forward signature.
    _run_checks(2, 3, 16, 16, seed=0)
    # Non-(8,128)-aligned spatial size (full-extent blocks): exercises the zero-pad
    # boundary band of the banded-matmul blur against the conv2d reference.
    _run_checks(1, 2, 24, 136, seed=1)
    print("KERNEL_OK")
</pallas_src>

<mosaic_0001>
module attributes {stable_mosaic.version = 11 : i64} {
  func.func @_fusion_mask_smooth_kernel(%arg0: i32, %arg1: memref<16x16xf32, #tpu.memory_space<vmem>>, %arg2: memref<16x16xf32, #tpu.memory_space<vmem>>, %arg3: memref<1x1x16x16xf32, #tpu.memory_space<vmem>>, %arg4: memref<1x3x16x16xf32, #tpu.memory_space<vmem>>, %arg5: memref<1x4x16x16xf32, #tpu.memory_space<vmem>>) attributes {dimension_semantics = [#tpu.dimension_semantics<parallel>], iteration_bounds = array<i64: 2>, scalar_prefetch = 0 : i64, scratch_operands = 0 : i64, tpu.core_type = #tpu.core_type<tc>, window_params = [{pipeline_mode = #tpu.pipeline_mode<synchronous>, transform_indices = @transform_0, window_bounds = array<i64: 16, 16>}, {pipeline_mode = #tpu.pipeline_mode<synchronous>, transform_indices = @transform_1, window_bounds = array<i64: 16, 16>}, {transform_indices = @transform_2, window_bounds = array<i64: 1, 1, 16, 16>}, {transform_indices = @transform_3, window_bounds = array<i64: 1, 3, 16, 16>}, {transform_indices = @transform_4, window_bounds = array<i64: 1, 4, 16, 16>}]} {
    %c0 = arith.constant 0 : index
    %c0_0 = arith.constant 0 : index
    %0 = vector.load %arg1[%c0, %c0_0] : memref<16x16xf32, #tpu.memory_space<vmem>>, vector<16x16xf32>
    %c0_1 = arith.constant 0 : index
    %c0_2 = arith.constant 0 : index
    %1 = vector.load %arg2[%c0_1, %c0_2] : memref<16x16xf32, #tpu.memory_space<vmem>>, vector<16x16xf32>
    %c0_3 = arith.constant 0 : index
    %c0_4 = arith.constant 0 : index
    %c0_5 = arith.constant 0 : index
    %c0_6 = arith.constant 0 : index
    %2 = vector.load %arg3[%c0_3, %c0_4, %c0_5, %c0_6] : memref<1x1x16x16xf32, #tpu.memory_space<vmem>>, vector<1x1x16x16xf32>
    %3 = vector.shape_cast %2 : vector<1x1x16x16xf32> to vector<16x16xf32>
    %4 = arith.negf %3 : vector<16x16xf32>
    %5 = math.exp %4 : vector<16x16xf32>
    %cst = arith.constant 1.000000e+00 : f32
    %6 = vector.broadcast %cst : f32 to vector<16x16xf32>
    %7 = arith.addf %6, %5 : vector<16x16xf32>
    %8 = arith.divf %6, %7 : vector<16x16xf32>
    %cst_7 = arith.constant dense<0.000000e+00> : vector<16x16xf32>
    %9 = tpu.matmul %0, %8, %cst_7 {dimension_numbers = #tpu.dot_dimension_numbers<[1], [0], [0], [1], [0, 0, 1, 1], [], []>} : vector<16x16xf32>, vector<16x16xf32>, vector<16x16xf32> -> vector<16x16xf32>
    %cst_8 = arith.constant dense<0.000000e+00> : vector<16x16xf32>
    %10 = tpu.matmul %9, %1, %cst_8 {dimension_numbers = #tpu.dot_dimension_numbers<[1], [0], [0], [1], [0, 0, 1, 1], [], []>} : vector<16x16xf32>, vector<16x16xf32>, vector<16x16xf32> -> vector<16x16xf32>
    %cst_9 = arith.constant 5.000000e-01 : f32
    %11 = vector.broadcast %cst_9 : f32 to vector<16x16xf32>
    %12 = arith.cmpf ogt, %10, %11 : vector<16x16xf32>
    %cst_10 = arith.constant 1.000000e+00 : f32
    %cst_11 = arith.constant 0.000000e+00 : f32
    %13 = vector.broadcast %cst_10 : f32 to vector<16x16xf32>
    %14 = vector.broadcast %cst_11 : f32 to vector<16x16xf32>
    %15 = arith.select %12, %13, %14 : vector<16x16xi1>, vector<16x16xf32>
    %c0_12 = arith.constant 0 : index
    %c0_13 = arith.constant 0 : index
    %c0_14 = arith.constant 0 : index
    %c0_15 = arith.constant 0 : index
    %16 = vector.load %arg5[%c0_12, %c0_13, %c0_14, %c0_15] : memref<1x4x16x16xf32, #tpu.memory_space<vmem>>, vector<1x1x16x16xf32>
    %17 = vector.shape_cast %16 : vector<1x1x16x16xf32> to vector<16x16xf32>
    %18 = vector.shape_cast %15 : vector<16x16xf32> to vector<1x1x16x16xf32>
    tpu.vector_store %arg5[%c0_12, %c0_13, %c0_14, %c0_15], %18 {strides = array<i32>} : memref<1x4x16x16xf32, #tpu.memory_space<vmem>>, vector<1x1x16x16xf32>,
    %c0_16 = arith.constant 0 : index
    %c0_17 = arith.constant 0 : index
    %c0_18 = arith.constant 0 : index
    %c0_19 = arith.constant 0 : index
    %19 = vector.load %arg4[%c0_16, %c0_17, %c0_18, %c0_19] : memref<1x3x16x16xf32, #tpu.memory_space<vmem>>, vector<1x1x16x16xf32>
    %20 = vector.shape_cast %19 : vector<1x1x16x16xf32> to vector<16x16xf32>
    %21 = arith.negf %20 : vector<16x16xf32>
    %22 = math.exp %21 : vector<16x16xf32>
    %cst_20 = arith.constant 1.000000e+00 : f32
    %23 = vector.broadcast %cst_20 : f32 to vector<16x16xf32>
    %24 = arith.addf %23, %22 : vector<16x16xf32>
    %25 = arith.divf %23, %24 : vector<16x16xf32>
    %cst_21 = arith.constant dense<0.000000e+00> : vector<16x16xf32>
    %26 = tpu.matmul %0, %25, %cst_21 {dimension_numbers = #tpu.dot_dimension_numbers<[1], [0], [0], [1], [0, 0, 1, 1], [], []>} : vector<16x16xf32>, vector<16x16xf32>, vector<16x16xf32> -> vector<16x16xf32>
    %cst_22 = arith.constant dense<0.000000e+00> : vector<16x16xf32>
    %27 = tpu.matmul %26, %1, %cst_22 {dimension_numbers = #tpu.dot_dimension_numbers<[1], [0], [0], [1], [0, 0, 1, 1], [], []>} : vector<16x16xf32>, vector<16x16xf32>, vector<16x16xf32> -> vector<16x16xf32>
    %cst_23 = arith.constant 5.000000e-01 : f32
    %28 = vector.broadcast %cst_23 : f32 to vector<16x16xf32>
    %29 = arith.cmpf ogt, %27, %28 : vector<16x16xf32>
    %cst_24 = arith.constant 1.000000e+00 : f32
    %cst_25 = arith.constant 0.000000e+00 : f32
    %30 = vector.broadcast %cst_24 : f32 to vector<16x16xf32>
    %31 = vector.broadcast %cst_25 : f32 to vector<16x16xf32>
    %32 = arith.select %29, %30, %31 : vector<16x16xi1>, vector<16x16xf32>
    %c0_26 = arith.constant 0 : index
    %c1 = arith.constant 1 : index
    %c0_27 = arith.constant 0 : index
    %c0_28 = arith.constant 0 : index
    %33 = vector.load %arg5[%c0_26, %c1, %c0_27, %c0_28] : memref<1x4x16x16xf32, #tpu.memory_space<vmem>>, vector<1x1x16x16xf32>
    %34 = vector.shape_cast %33 : vector<1x1x16x16xf32> to vector<16x16xf32>
    %35 = vector.shape_cast %32 : vector<16x16xf32> to vector<1x1x16x16xf32>
    tpu.vector_store %arg5[%c0_26, %c1, %c0_27, %c0_28], %35 {strides = array<i32>} : memref<1x4x16x16xf32, #tpu.memory_space<vmem>>, vector<1x1x16x16xf32>,
    %c0_29 = arith.constant 0 : index
    %c1_30 = arith.constant 1 : index
    %c0_31 = arith.constant 0 : index
    %c0_32 = arith.constant 0 : index
    %36 = vector.load %arg4[%c0_29, %c1_30, %c0_31, %c0_32] : memref<1x3x16x16xf32, #tpu.memory_space<vmem>>, vector<1x1x16x16xf32>
    %37 = vector.shape_cast %36 : vector<1x1x16x16xf32> to vector<16x16xf32>
    %38 = arith.negf %37 : vector<16x16xf32>
    %39 = math.exp %38 : vector<16x16xf32>
    %cst_33 = arith.constant 1.000000e+00 : f32
    %40 = vector.broadcast %cst_33 : f32 to vector<16x16xf32>
    %41 = arith.addf %40, %39 : vector<16x16xf32>
    %42 = arith.divf %40, %41 : vector<16x16xf32>
    %cst_34 = arith.constant dense<0.000000e+00> : vector<16x16xf32>
    %43 = tpu.matmul %0, %42, %cst_34 {dimension_numbers = #tpu.dot_dimension_numbers<[1], [0], [0], [1], [0, 0, 1, 1], [], []>} : vector<16x16xf32>, vector<16x16xf32>, vector<16x16xf32> -> vector<16x16xf32>
    %cst_35 = arith.constant dense<0.000000e+00> : vector<16x16xf32>
    %44 = tpu.matmul %43, %1, %cst_35 {dimension_numbers = #tpu.dot_dimension_numbers<[1], [0], [0], [1], [0, 0, 1, 1], [], []>} : vector<16x16xf32>, vector<16x16xf32>, vector<16x16xf32> -> vector<16x16xf32>
    %cst_36 = arith.constant 5.000000e-01 : f32
    %45 = vector.broadcast %cst_36 : f32 to vector<16x16xf32>
    %46 = arith.cmpf ogt, %44, %45 : vector<16x16xf32>
    %cst_37 = arith.constant 1.000000e+00 : f32
    %cst_38 = arith.constant 0.000000e+00 : f32
    %47 = vector.broadcast %cst_37 : f32 to vector<16x16xf32>
    %48 = vector.broadcast %cst_38 : f32 to vector<16x16xf32>
    %49 = arith.select %46, %47, %48 : vector<16x16xi1>, vector<16x16xf32>
    %c0_39 = arith.constant 0 : index
    %c2 = arith.constant 2 : index
    %c0_40 = arith.constant 0 : index
    %c0_41 = arith.constant 0 : index
    %50 = vector.load %arg5[%c0_39, %c2, %c0_40, %c0_41] : memref<1x4x16x16xf32, #tpu.memory_space<vmem>>, vector<1x1x16x16xf32>
    %51 = vector.shape_cast %50 : vector<1x1x16x16xf32> to vector<16x16xf32>
    %52 = vector.shape_cast %49 : vector<16x16xf32> to vector<1x1x16x16xf32>
    tpu.vector_store %arg5[%c0_39, %c2, %c0_40, %c0_41], %52 {strides = array<i32>} : memref<1x4x16x16xf32, #tpu.memory_space<vmem>>, vector<1x1x16x16xf32>,
    %c0_42 = arith.constant 0 : index
    %c2_43 = arith.constant 2 : index
    %c0_44 = arith.constant 0 : index
    %c0_45 = arith.constant 0 : index
    %53 = vector.load %arg4[%c0_42, %c2_43, %c0_44, %c0_45] : memref<1x3x16x16xf32, #tpu.memory_space<vmem>>, vector<1x1x16x16xf32>
    %54 = vector.shape_cast %53 : vector<1x1x16x16xf32> to vector<16x16xf32>
    %55 = arith.negf %54 : vector<16x16xf32>
    %56 = math.exp %55 : vector<16x16xf32>
    %cst_46 = arith.constant 1.000000e+00 : f32
    %57 = vector.broadcast %cst_46 : f32 to vector<16x16xf32>
    %58 = arith.addf %57, %56 : vector<16x16xf32>
    %59 = arith.divf %57, %58 : vector<16x16xf32>
    %cst_47 = arith.constant dense<0.000000e+00> : vector<16x16xf32>
    %60 = tpu.matmul %0, %59, %cst_47 {dimension_numbers = #tpu.dot_dimension_numbers<[1], [0], [0], [1], [0, 0, 1, 1], [], []>} : vector<16x16xf32>, vector<16x16xf32>, vector<16x16xf32> -> vector<16x16xf32>
    %cst_48 = arith.constant dense<0.000000e+00> : vector<16x16xf32>
    %61 = tpu.matmul %60, %1, %cst_48 {dimension_numbers = #tpu.dot_dimension_numbers<[1], [0], [0], [1], [0, 0, 1, 1], [], []>} : vector<16x16xf32>, vector<16x16xf32>, vector<16x16xf32> -> vector<16x16xf32>
    %cst_49 = arith.constant 5.000000e-01 : f32
    %62 = vector.broadcast %cst_49 : f32 to vector<16x16xf32>
    %63 = arith.cmpf ogt, %61, %62 : vector<16x16xf32>
    %cst_50 = arith.constant 1.000000e+00 : f32
    %cst_51 = arith.constant 0.000000e+00 : f32
    %64 = vector.broadcast %cst_50 : f32 to vector<16x16xf32>
    %65 = vector.broadcast %cst_51 : f32 to vector<16x16xf32>
    %66 = arith.select %63, %64, %65 : vector<16x16xi1>, vector<16x16xf32>
    %c0_52 = arith.constant 0 : index
    %c3 = arith.constant 3 : index
    %c0_53 = arith.constant 0 : index
    %c0_54 = arith.constant 0 : index
    %67 = vector.load %arg5[%c0_52, %c3, %c0_53, %c0_54] : memref<1x4x16x16xf32, #tpu.memory_space<vmem>>, vector<1x1x16x16xf32>
    %68 = vector.shape_cast %67 : vector<1x1x16x16xf32> to vector<16x16xf32>
    %69 = vector.shape_cast %66 : vector<16x16xf32> to vector<1x1x16x16xf32>
    tpu.vector_store %arg5[%c0_52, %c3, %c0_53, %c0_54], %69 {strides = array<i32>} : memref<1x4x16x16xf32, #tpu.memory_space<vmem>>, vector<1x1x16x16xf32>,
    return
  }
  func.func @transform_0(%arg0: i32) -> (i32, i32) {
    %c0_i32 = arith.constant 0 : i32
    %c0_i32_0 = arith.constant 0 : i32
    %c0_i32_1 = arith.constant 0 : i32
    return %c0_i32, %c0_i32_0 : i32, i32
  }
  func.func @transform_1(%arg0: i32) -> (i32, i32) {
    %c0_i32 = arith.constant 0 : i32
    %c0_i32_0 = arith.constant 0 : i32
    %c0_i32_1 = arith.constant 0 : i32
    return %c0_i32, %c0_i32_0 : i32, i32
  }
  func.func @transform_2(%arg0: i32) -> (i32, i32, i32, i32) {
    %c0_i32 = arith.constant 0 : i32
    %c0_i32_0 = arith.constant 0 : i32
    %c0_i32_1 = arith.constant 0 : i32
    %c0_i32_2 = arith.constant 0 : i32
    return %arg0, %c0_i32, %c0_i32_0, %c0_i32_1 : i32, i32, i32, i32
  }
  func.func @transform_3(%arg0: i32) -> (i32, i32, i32, i32) {
    %c0_i32 = arith.constant 0 : i32
    %c0_i32_0 = arith.constant 0 : i32
    %c0_i32_1 = arith.constant 0 : i32
    %c0_i32_2 = arith.constant 0 : i32
    return %arg0, %c0_i32, %c0_i32_0, %c0_i32_1 : i32, i32, i32, i32
  }
  func.func @transform_4(%arg0: i32) -> (i32, i32, i32, i32) {
    %c0_i32 = arith.constant 0 : i32
    %c0_i32_0 = arith.constant 0 : i32
    %c0_i32_1 = arith.constant 0 : i32
    %c0_i32_2 = arith.constant 0 : i32
    return %arg0, %c0_i32, %c0_i32_0, %c0_i32_1 : i32, i32, i32, i32
  }
}

</mosaic_0001>

<llo_original>
// kernel: tpu_custom_call.1
$region0: #{tpu_custom_call.1}
  #allocation0 [shape = 'u32[]', space=smem, size = 0x4, offset = 0x4, fixed_abs, tag = 'smem constant byte address 0x4 - core index']
  #allocation1 [shape = 'u32[144,128]{1,0:T(1,128)}', space=vmem, size = 0x12000, scoped, tag = 'internal scratch']
  %s0 = inlined_call_operand.hbm [shape: f32[16,16], index: 0, kind: input, shape index: {}]
  %s1 = inlined_call_operand.hbm [shape: f32[16,16], index: 1, kind: input, shape index: {}]
  %s2 = inlined_call_operand.hbm [shape: f32[2,1,16,16], index: 2, kind: input, shape index: {}]
  %s3 = inlined_call_operand.hbm [shape: f32[2,3,16,16], index: 3, kind: input, shape index: {}]
  %s4 = inlined_call_operand.hbm [shape: f32[2,4,16,16], index: 4, kind: output, shape index: {}]
  %s5 = sld [smem:[#allocation0]]
  $region65: #{tpu_custom_call.1} parent=0
    _
  %s7 = ssub.s32 1, %s5
  %s8 = scalar_select 0, %s7, %s5
  $region1: #{tpu_custom_call.1} parent=0
    #allocation2 [shape = 'u8[8192]{0}', space=vmem, size = 0x2000, scoped, tag = 'input window, operand 0, single buffered']
    #allocation3 [shape = 's32[2]{0}', space=sflag, size = 0x8, scoped, tag = 'scoped memory for tpu_custom_call.1']
    #allocation4 [shape = 's32[2]{0}', space=sflag, size = 0x8, scoped, tag = 'scoped memory for tpu_custom_call.1']
    #allocation5 [shape = 'u8[8192]{0}', space=vmem, size = 0x2000, scoped, tag = 'input window, operand 1, single buffered']
    #allocation6 [shape = 's32[1]{0}', space=sflag, size = 0x4, scoped, tag = 'scoped memory for tpu_custom_call.1']
    #allocation7 [shape = 'u8[16384]{0}', space=vmem, size = 0x4000, scoped, tag = 'input window, operand 2']
    #allocation8 [shape = 'u8[49152]{0}', space=vmem, size = 0xc000, scoped, tag = 'input window, operand 3']
    #allocation9 [shape = 'u8[65536]{0}', space=vmem, size = 0x10000, scoped, tag = 'output window, operand 0']
    %9 = vsyncpa [#allocation3], 0
    %10 = vsyncpa [#allocation6], 0
    %11 = vsyncpa [#allocation4], 0
    %s12 = scalar_lea.sflag [#allocation4], 1
    %13 = vsyncpa %s12, 0
    loop: start=0, step=1, limit=4
    $region2: #{tpu_custom_call.1} parent=1 // loop_pre_header
      _
    $region3: #{tpu_custom_call.1} parent=1 // loop_header
      %s15 = sphi 0, %s19
      %p16 = scmp.ge.s32.totalorder %s15, 4
      %s23 = sphi 0, %s23
      %s25 = sphi 0, %s23
      %s26 = sphi 0, %s25
      %s40 = sphi 0, %s26
      %s44 = sphi 0, %s44
      %s46 = sphi 0, %s44
      %s47 = sphi 0, %s46
      %s61 = sphi 0, %s47
      %s67 = sphi 0, %s69
      %s70 = sphi 0, %s67
      %s71 = sphi 0, %s70
      %s87 = sphi 0, %s71
      %s93 = sphi 0, %s95
      %s96 = sphi 0, %s93
      %s97 = sphi 0, %s96
      %s113 = sphi 0, %s97
      %s119 = sphi 0, %s121
      %s122 = sphi 0, %s119
      %s123 = sphi 0, %s122
      %s139 = sphi 0, %s123
    $region4: #{tpu_custom_call.1} parent=1 // loop_header_branch
      %18 = sbr.rel (%p16) target = $region8
    $region5: #{tpu_custom_call.1} parent=1 // loop_body
      %s20 = ssub.s32 %s15, 1
      %s21 = ssub.s32 %s15, 2
      %s22 = sadd.s32 %s15, 1
      %s24 = sadd.s32 %s23, 1
      %p27 = scmp.eq.s32.totalorder %s15, 1
      %p28 = scmp.ne.s32.totalorder %s23, %s25
      %p29 = scmp.eq.s32.totalorder %s15, 0
      %p30 = por %p28, %p29
      %p31 = scmp.ne.s32.totalorder %s23, %s25
      %p32 = scmp.eq.s32.totalorder %s20, 1
      %p33 = por %p31, %p32
      %p34 = scmp.ne.s32.totalorder %s25, %s26
      %p35 = scmp.eq.s32.totalorder %s20, 0
      %p36 = por %p34, %p35
      %p37 = scmp.ne.s32.totalorder %s25, %s26
      %p38 = scmp.eq.s32.totalorder %s21, 1
      %p39 = por %p37, %p38
      %p41 = scmp.ne.s32.totalorder %s26, %s40
      %p42 = scmp.eq.s32.totalorder %s21, 0
      %p43 = por %p41, %p42
      %s45 = sadd.s32 %s44, 1
      %p48 = scmp.eq.s32.totalorder %s15, 1
      %p49 = scmp.ne.s32.totalorder %s44, %s46
      %p50 = scmp.eq.s32.totalorder %s15, 0
      %p51 = por %p49, %p50
      %p52 = scmp.ne.s32.totalorder %s44, %s46
      %p53 = scmp.eq.s32.totalorder %s20, 1
      %p54 = por %p52, %p53
      %p55 = scmp.ne.s32.totalorder %s46, %s47
      %p56 = scmp.eq.s32.totalorder %s20, 0
      %p57 = por %p55, %p56
      %p58 = scmp.ne.s32.totalorder %s46, %s47
      %p59 = scmp.eq.s32.totalorder %s21, 1
      %p60 = por %p58, %p59
      %p62 = scmp.ne.s32.totalorder %s47, %s61
      %p63 = scmp.eq.s32.totalorder %s21, 0
      %p64 = por %p62, %p63
      %s65 = ssub.s32 %s15, %s22
      %p66 = scmp.eq.s32.totalorder %s65, 0
      %s68 = sadd.s32 %s67, 1
      %s69 = scalar_select %p66, %s67, %s68
      %p72 = pneg %p66
      %p73 = scmp.eq.s32.totalorder %s15, 1
      %p74 = por %p72, %p73
      %p75 = scmp.ne.s32.totalorder %s67, %s70
      %p76 = scmp.eq.s32.totalorder %s15, 0
      %p77 = por %p75, %p76
      %p78 = scmp.ne.s32.totalorder %s67, %s70
      %p79 = scmp.eq.s32.totalorder %s20, 1
      %p80 = por %p78, %p79
      %p81 = scmp.ne.s32.totalorder %s70, %s71
      %p82 = scmp.eq.s32.totalorder %s20, 0
      %p83 = por %p81, %p82
      %p84 = scmp.ne.s32.totalorder %s70, %s71
      %p85 = scmp.eq.s32.totalorder %s21, 1
      %p86 = por %p84, %p85
      %p88 = scmp.ne.s32.totalorder %s71, %s87
      %p89 = scmp.eq.s32.totalorder %s21, 0
      %p90 = por %p88, %p89
      %s91 = ssub.s32 %s15, %s22
      %p92 = scmp.eq.s32.totalorder %s91, 0
      %s94 = sadd.s32 %s93, 1
      %s95 = scalar_select %p92, %s93, %s94
      %p98 = pneg %p92
      %p99 = scmp.eq.s32.totalorder %s15, 1
      %p100 = por %p98, %p99
      %p101 = scmp.ne.s32.totalorder %s93, %s96
      %p102 = scmp.eq.s32.totalorder %s15, 0
      %p103 = por %p101, %p102
      %p104 = scmp.ne.s32.totalorder %s93, %s96
      %p105 = scmp.eq.s32.totalorder %s20, 1
      %p106 = por %p104, %p105
      %p107 = scmp.ne.s32.totalorder %s96, %s97
      %p108 = scmp.eq.s32.totalorder %s20, 0
      %p109 = por %p107, %p108
      %p110 = scmp.ne.s32.totalorder %s96, %s97
      %p111 = scmp.eq.s32.totalorder %s21, 1
      %p112 = por %p110, %p111
      %p114 = scmp.ne.s32.totalorder %s97, %s113
      %p115 = scmp.eq.s32.totalorder %s21, 0
      %p116 = por %p114, %p115
      %s117 = ssub.s32 %s15, %s22
      %p118 = scmp.eq.s32.totalorder %s117, 0
      %s120 = sadd.s32 %s119, 1
      %s121 = scalar_select %p118, %s119, %s120
      %p124 = pneg %p118
      %p125 = scmp.eq.s32.totalorder %s15, 1
      %p126 = por %p124, %p125
      %p127 = scmp.ne.s32.totalorder %s119, %s122
      %p128 = scmp.eq.s32.totalorder %s15, 0
      %p129 = por %p127, %p128
      %p130 = scmp.ne.s32.totalorder %s119, %s122
      %p131 = scmp.eq.s32.totalorder %s20, 1
      %p132 = por %p130, %p131
      %p133 = scmp.ne.s32.totalorder %s122, %s123
      %p134 = scmp.eq.s32.totalorder %s20, 0
      %p135 = por %p133, %p134
      %p136 = scmp.ne.s32.totalorder %s122, %s123
      %p137 = scmp.eq.s32.totalorder %s21, 1
      %p138 = por %p136, %p137
      %p140 = scmp.ne.s32.totalorder %s123, %s139
      %p141 = scmp.eq.s32.totalorder %s21, 0
      %p142 = por %p140, %p141
      %p143 = scmp.le.s32.totalorder 1, %s15
      %p144 = scmp.lt.s32.totalorder %s15, 3
      %p145 = pnand %p143, %p144
      %p146 = pneg %p145
      // Predicated region
      $region9: #{tpu_custom_call.1} parent=5 // pred_check
        _
      $region10: #{tpu_custom_call.1} parent=5 // pred_check_branch
        %148 = sbr.rel (%p145) target = $region12
      $region11: #{tpu_custom_call.1} parent=5 // pred_region
        %s149 = ssub.s32 %s15, 1
        // Predicated region
        $region13: #{tpu_custom_call.1} parent=11 // pred_check
          %p150 = pneg %p36
        $region14: #{tpu_custom_call.1} parent=11 // pred_check_branch
          %152 = sbr.rel (%p150) target = $region16
        $region15: #{tpu_custom_call.1} parent=11 // pred_region
          %s154 = ssub.s32 256, 256
          %155 = vsyncadd [#allocation3], %s154
          %s156 = sshll.u32 [#allocation2], 4
          %s157 = int_to_ptr.vmem [resolvable:$true] %s156
          %162 = dma.hbm_to_vmem [thread:$0]  %s0, 256, %s157, [#allocation3], 128, 128, 8
        $region16: #{tpu_custom_call.1} parent=11 // pred_fallthru
          _
        // Predicated region
        $region17: #{tpu_custom_call.1} parent=11 // pred_check
          %p163 = pneg %p57
        $region18: #{tpu_custom_call.1} parent=11 // pred_check_branch
          %165 = sbr.rel (%p163) target = $region20
        $region19: #{tpu_custom_call.1} parent=11 // pred_region
          %s167 = ssub.s32 256, 256
          %168 = vsyncadd [#allocation6], %s167
          %s169 = sshll.u32 [#allocation5], 4
          %s170 = int_to_ptr.vmem [resolvable:$true] %s169
          %175 = dma.hbm_to_vmem [thread:$0]  %s1, 256, %s170, [#allocation6], 128, 128, 8
        $region20: #{tpu_custom_call.1} parent=11 // pred_fallthru
          _
      $region12: #{tpu_custom_call.1} parent=5 // pred_fallthru
        _
      %p176 = scmp.lt.s32.totalorder %s15, 2
      // Predicated region
      $region21: #{tpu_custom_call.1} parent=5 // pred_check
        %p177 = pneg %p176
      $region22: #{tpu_custom_call.1} parent=5 // pred_check_branch
        %179 = sbr.rel (%p177) target = $region24
      $region23: #{tpu_custom_call.1} parent=5 // pred_region
        // Predicated region
        $region25: #{tpu_custom_call.1} parent=23 // pred_check
          %p180 = pneg %p77
        $region26: #{tpu_custom_call.1} parent=23 // pred_check_branch
          %182 = sbr.rel (%p180) target = $region28
        $region27: #{tpu_custom_call.1} parent=23 // pred_region
          %s183 = sand.u32 %s15, 1
          %s184 = scalar_lea.sflag [#allocation3], %s183
          %s185 = sand.u32 %s67, 1
          %s186 = smul.addr %s185, 16
          %s187 = scalar_lea.vmem [#allocation7], %s186
          %s189 = ssub.s32 256, 256
          %190 = vsyncadd %s184, %s189
          %s191 = smul.addr %s15, 2
          %s192 = smul.addr %s191, 128
          %s193 = scalar_lea.hbm %s2, %s192
          %s194 = sshll.u32 %s187, 4
          %s195 = int_to_ptr.vmem [resolvable:$true] %s194
          %200 = dma.hbm_to_vmem [thread:$0]  %s193, 256, %s195, %s184, 128, 128, 8
        $region28: #{tpu_custom_call.1} parent=23 // pred_fallthru
          _
        // Predicated region
        $region29: #{tpu_custom_call.1} parent=23 // pred_check
          %p201 = pneg %p103
        $region30: #{tpu_custom_call.1} parent=23 // pred_check_branch
          %203 = sbr.rel (%p201) target = $region32
        $region31: #{tpu_custom_call.1} parent=23 // pred_region
          %s204 = sand.u32 %s15, 1
          %s205 = scalar_lea.sflag [#allocation3], %s204
          %s206 = sand.u32 %s93, 1
          %s207 = smul.addr %s206, 48
          %s208 = scalar_lea.vmem [#allocation8], %s207
          %s210 = ssub.s32 768, 768
          %211 = vsyncadd %s205, %s210
          %s212 = smul.addr %s15, 6
          %s213 = smul.addr %s212, 128
          %s214 = scalar_lea.hbm %s3, %s213
          %s215 = sshll.u32 %s208, 4
          %s216 = int_to_ptr.vmem [resolvable:$true] %s215
          %221 = dma.hbm_to_vmem [thread:$0]  %s214, 768, %s216, %s205, 128, 128, 8
        $region32: #{tpu_custom_call.1} parent=23 // pred_fallthru
          _
      $region24: #{tpu_custom_call.1} parent=5 // pred_fallthru
        _
      %p222 = scmp.le.s32.totalorder 1, %s15
      %p223 = scmp.lt.s32.totalorder %s15, 3
      %p224 = pnand %p222, %p223
      %p225 = pneg %p224
      // Predicated region
      $region33: #{tpu_custom_call.1} parent=5 // pred_check
        _
      $region34: #{tpu_custom_call.1} parent=5 // pred_check_branch
        %227 = sbr.rel (%p224) target = $region36
      $region35: #{tpu_custom_call.1} parent=5 // pred_region
        %s228 = ssub.s32 %s15, 1
        // Predicated region
        $region37: #{tpu_custom_call.1} parent=35 // pred_check
          %p229 = pneg %p36
        $region38: #{tpu_custom_call.1} parent=35 // pred_check_branch
          %231 = sbr.rel (%p229) target = $region40
        $region39: #{tpu_custom_call.1} parent=35 // pred_region
          %232 = dma.done [#allocation3], 256
        $region40: #{tpu_custom_call.1} parent=35 // pred_fallthru
          _
        // Predicated region
        $region41: #{tpu_custom_call.1} parent=35 // pred_check
          %p233 = pneg %p57
        $region42: #{tpu_custom_call.1} parent=35 // pred_check_branch
          %235 = sbr.rel (%p233) target = $region44
        $region43: #{tpu_custom_call.1} parent=35 // pred_region
          %236 = dma.done [#allocation6], 256
        $region44: #{tpu_custom_call.1} parent=35 // pred_fallthru
          _
        %s237 = sand.u32 %s20, 1
        %s238 = scalar_lea.sflag [#allocation3], %s237
        %s239 = sand.u32 %s70, 1
        %s240 = smul.addr %s239, 16
        %s241 = scalar_lea.vmem [#allocation7], %s240
        // Predicated region
        $region45: #{tpu_custom_call.1} parent=35 // pred_check
          %p242 = pneg %p83
        $region46: #{tpu_custom_call.1} parent=35 // pred_check_branch
          %244 = sbr.rel (%p242) target = $region48
        $region47: #{tpu_custom_call.1} parent=35 // pred_region
          %245 = dma.done %s238, 256
        $region48: #{tpu_custom_call.1} parent=35 // pred_fallthru
          _
        %s246 = sand.u32 %s20, 1
        %s247 = scalar_lea.sflag [#allocation3], %s246
        %s248 = sand.u32 %s96, 1
        %s249 = smul.addr %s248, 48
        %s250 = scalar_lea.vmem [#allocation8], %s249
        // Predicated region
        $region49: #{tpu_custom_call.1} parent=35 // pred_check
          %p251 = pneg %p109
        $region50: #{tpu_custom_call.1} parent=35 // pred_check_branch
          %253 = sbr.rel (%p251) target = $region52
        $region51: #{tpu_custom_call.1} parent=35 // pred_region
          %254 = dma.done %s247, 768
        $region52: #{tpu_custom_call.1} parent=35 // pred_fallthru
          _
        %p255 = pneg %p36
        %p256 = pneg %p33
        %p257 = pneg %p57
        %p258 = pneg %p54
        %s259 = sand.u32 %s20, 1
        %s260 = scalar_lea.sflag [#allocation3], %s259
        %s261 = sand.u32 %s70, 1
        %s262 = smul.addr %s261, 16
        %s263 = scalar_lea.vmem [#allocation7], %s262
        %p264 = pneg %p83
        %p265 = pneg %p80
        %s266 = sand.u32 %s20, 1
        %s267 = scalar_lea.sflag [#allocation3], %s266
        %s268 = sand.u32 %s96, 1
        %s269 = smul.addr %s268, 48
        %s270 = scalar_lea.vmem [#allocation8], %s269
        %p271 = pneg %p109
        %p272 = pneg %p106
        %p273 = pneg %p135
        %p274 = pneg %p132
        %s275 = sand.u32 %s122, 1
        %s276 = scalar_lea.sflag [#allocation4], %s275
        %s277 = sand.u32 %s122, 1
        %s278 = smul.addr %s277, 64
        %s279 = scalar_lea.vmem [#allocation9], %s278
        %v280 = vld [vmem:[#allocation2] sm:$0xff]
        %v281 = vld [vmem:[#allocation2 + $0x8] sm:$0xff]
        %v282 = vld [vmem:[#allocation5] sm:$0xff]
        %v283 = vld [vmem:[#allocation5 + $0x8] sm:$0xff]
        %v284 = vld [vmem:[%s241] sm:$0xff]
        %v285 = vld [vmem:[%s241 + $0x8] sm:$0xff]
        %v286 = vxor.u32 %v284, 2147483648
        %v287 = vxor.u32 %v285, 2147483648
        %v288 = vmul.f32 %v286, 1.442695
        %v289 = vpow.pop %v288
        %v290 = vmul.f32 %v287, 1.442695
        %v291 = vpow.pop %v290
        %v292 = vadd.f32 %v289, 1.0
        %v293 = vadd.f32 %v291, 1.0
        %v294 = vrcp.pop %v292
        %v295 = vmul.f32 1.0, %v294
        %v296 = vrcp.pop %v293
        %v297 = vmul.f32 1.0, %v296
        %vm298 = vcmask 130048
        %v300 = vsel %vm298, %v280, 0
        %v303 = vsel %vm298, %v281, 0
        %305 = vmatprep.subr.mxu0 0.0
        %306 = vmatpush1.msra.mxu0 %v295
        %307 = vmatprep.subr.mxu0 0.0
        %308 = vmatpush1.msra.mxu0 %v297
        %309 = vmatprep.subr.mxu0 0.0
        %310 = vmatpush1.msra.mxu0 0.0
        %311 = vmatprep.subr.mxu0 0.0
        %312 = vmatpush1.msra.mxu0 0.0
        %313 = vmatprep.subr.mxu0 0.0
        %314 = vmatpush1.msra.mxu0 0.0
        %315 = vmatprep.subr.mxu0 0.0
        %316 = vmatpush1.msra.mxu0 0.0
        %317 = vmatprep.subr.mxu0 0.0
        %318 = vmatpush1.msra.mxu0 0.0
        %319 = vmatprep.subr.mxu0 0.0
        %320 = vmatpush1.msra.mxu0 0.0
        %321 = vmatprep.subr.mxu0 0.0
        %322 = vmatpush1.msra.mxu0 0.0
        %323 = vmatprep.subr.mxu0 0.0
        %324 = vmatpush1.msra.mxu0 0.0
        %325 = vmatprep.subr.mxu0 0.0
        %326 = vmatpush1.msra.mxu0 0.0
        %327 = vmatprep.subr.mxu0 0.0
        %328 = vmatpush1.msra.mxu0 0.0
        %329 = vmatprep.subr.mxu0 0.0
        %330 = vmatpush1.msra.mxu0 0.0
        %331 = vmatprep.subr.mxu0 0.0
        %332 = vmatpush1.msra.mxu0 0.0
        %333 = vmatprep.subr.mxu0 0.0
        %334 = vmatpush1.msra.mxu0 0.0
        %335 = vmatprep.subr.mxu0 0.0
        %336 = vmatpush1.msra.mxu0 0.0
        %337 = vmatprep.subr.mxu0 0.0
        %338 = vmatpush1.msra.mxu0 0.0
        %339 = vmatprep.subr.mxu0 0.0
        %340 = vmatpush1.msra.mxu0 0.0
        %341 = vmatprep.subr.mxu0 0.0
        %342 = vmatpush1.msra.mxu0 0.0
        %343 = vmatprep.subr.mxu0 0.0
        %344 = vmatpush1.msra.mxu0 0.0
        %345 = vmatprep.subr.mxu0 0.0
        %346 = vmatpush1.msra.mxu0 0.0
        %347 = vmatprep.subr.mxu0 0.0
        %348 = vmatpush1.msra.mxu0 0.0
        %349 = vmatprep.subr.mxu0 0.0
        %350 = vmatpush1.msra.mxu0 0.0
        %351 = vmatprep.subr.mxu0 0.0
        %352 = vmatpush1.msra.mxu0 0.0
        %353 = vmatprep.subr.mxu0 0.0
        %354 = vmatpush1.msra.mxu0 0.0
        %355 = vmatprep.subr.mxu0 0.0
        %356 = vmatpush1.msra.mxu0 0.0
        %357 = vmatprep.subr.mxu0 0.0
        %358 = vmatpush1.msra.mxu0 0.0
        %359 = vmatprep.subr.mxu0 0.0
        %360 = vmatpush1.msra.mxu0 0.0
        %361 = vmatprep.subr.mxu0 0.0
        %362 = vmatpush1.msra.mxu0 0.0
        %363 = vmatprep.subr.mxu0 0.0
        %364 = vmatpush1.msra.mxu0 0.0
        %365 = vmatprep.subr.mxu0 0.0
        %366 = vmatpush1.msra.mxu0 0.0
        %367 = vmatprep.subr.mxu0 0.0
        %368 = vmatpush1.msra.mxu0 0.0
        %369 = vmatprep.mubr.f32.mxu0 0.0
        %370 = vmatmul.mubr.f32.gmra.mrb[0].mxu0 %v300
        %v371 = vpop.f32.mrb[0].mxu0
        %v372 = vadd.f32 0.0, %v371
        %v373 = vpop.f32.mrb[0].mxu0
        %374 = vmatprep.mubr.f32.mxu0 0.0
        %375 = vmatmul.mubr.f32.gmra.mrb[0].mxu0 %v303
        %v376 = vpop.f32.mrb[0].mxu0
        %v377 = vadd.f32 0.0, %v376
        %v378 = vpop.f32.mrb[0].mxu0
        %379 = vdwg.mxu0
        %v381 = vsel %vm298, %v372, 0
        %v384 = vsel %vm298, %v377, 0
        %386 = vmatprep.subr.mxu0 0.0
        %387 = vmatpush1.msra.mxu0 %v282
        %388 = vmatprep.subr.mxu0 0.0
        %389 = vmatpush1.msra.mxu0 %v283
        %390 = vmatprep.subr.mxu0 0.0
        %391 = vmatpush1.msra.mxu0 0.0
        %392 = vmatprep.subr.mxu0 0.0
        %393 = vmatpush1.msra.mxu0 0.0
        %394 = vmatprep.subr.mxu0 0.0
        %395 = vmatpush1.msra.mxu0 0.0
        %396 = vmatprep.subr.mxu0 0.0
        %397 = vmatpush1.msra.mxu0 0.0
        %398 = vmatprep.subr.mxu0 0.0
        %399 = vmatpush1.msra.mxu0 0.0
        %400 = vmatprep.subr.mxu0 0.0
        %401 = vmatpush1.msra.mxu0 0.0
        %402 = vmatprep.subr.mxu0 0.0
        %403 = vmatpush1.msra.mxu0 0.0
        %404 = vmatprep.subr.mxu0 0.0
        %405 = vmatpush1.msra.mxu0 0.0
        %406 = vmatprep.subr.mxu0 0.0
        %407 = vmatpush1.msra.mxu0 0.0
        %408 = vmatprep.subr.mxu0 0.0
        %409 = vmatpush1.msra.mxu0 0.0
        %410 = vmatprep.subr.mxu0 0.0
        %411 = vmatpush1.msra.mxu0 0.0
        %412 = vmatprep.subr.mxu0 0.0
        %413 = vmatpush1.msra.mxu0 0.0
        %414 = vmatprep.subr.mxu0 0.0
        %415 = vmatpush1.msra.mxu0 0.0
        %416 = vmatprep.subr.mxu0 0.0
        %417 = vmatpush1.msra.mxu0 0.0
        %418 = vmatprep.subr.mxu0 0.0
        %419 = vmatpush1.msra.mxu0 0.0
        %420 = vmatprep.subr.mxu0 0.0
        %421 = vmatpush1.msra.mxu0 0.0
        %422 = vmatprep.subr.mxu0 0.0
        %423 = vmatpush1.msra.mxu0 0.0
        %424 = vmatprep.subr.mxu0 0.0
        %425 = vmatpush1.msra.mxu0 0.0
        %426 = vmatprep.subr.mxu0 0.0
        %427 = vmatpush1.msra.mxu0 0.0
        %428 = vmatprep.subr.mxu0 0.0
        %429 = vmatpush1.msra.mxu0 0.0
        %430 = vmatprep.subr.mxu0 0.0
        %431 = vmatpush1.msra.mxu0 0.0
        %432 = vmatprep.subr.mxu0 0.0
        %433 = vmatpush1.msra.mxu0 0.0
        %434 = vmatprep.subr.mxu0 0.0
        %435 = vmatpush1.msra.mxu0 0.0
        %436 = vmatprep.subr.mxu0 0.0
        %437 = vmatpush1.msra.mxu0 0.0
        %438 = vmatprep.subr.mxu0 0.0
        %439 = vmatpush1.msra.mxu0 0.0
        %440 = vmatprep.subr.mxu0 0.0
        %441 = vmatpush1.msra.mxu0 0.0
        %442 = vmatprep.subr.mxu0 0.0
        %443 = vmatpush1.msra.mxu0 0.0
        %444 = vmatprep.subr.mxu0 0.0
        %445 = vmatpush1.msra.mxu0 0.0
        %446 = vmatprep.subr.mxu0 0.0
        %447 = vmatpush1.msra.mxu0 0.0
        %448 = vmatprep.subr.mxu0 0.0
        %449 = vmatpush1.msra.mxu0 0.0
        %450 = vmatprep.mubr.f32.mxu0 0.0
        %451 = vmatmul.mubr.f32.gmra.mrb[0].mxu0 %v381
        %v452 = vpop.f32.mrb[0].mxu0
        %v453 = vadd.f32 0.0, %v452
        %v454 = vpop.f32.mrb[0].mxu0
        %455 = vmatprep.mubr.f32.mxu0 0.0
        %456 = vmatmul.mubr.f32.gmra.mrb[0].mxu0 %v384
        %v457 = vpop.f32.mrb[0].mxu0
        %v458 = vadd.f32 0.0, %v457
        %v459 = vpop.f32.mrb[0].mxu0
        %460 = vdwg.mxu0
        %vm461 = vcmp.gt.f32.partialorder %v453, 0.5
        %vm462 = vcmp.gt.f32.partialorder %v458, 0.5
        %v463 = vsel %vm461, 1.0, 0.0
        %v464 = vsel %vm462, 1.0, 0.0
        %465 = vst.msk [vmem:[%s279] sm:$0xff] %vm298, %v463
        %466 = vst.msk [vmem:[%s279 + $0x8] sm:$0xff] %vm298, %v464
        %v467 = vld [vmem:[%s250] sm:$0xff]
        %v468 = vld [vmem:[%s250 + $0x8] sm:$0xff]
        %v469 = vxor.u32 %v467, 2147483648
        %v470 = vxor.u32 %v468, 2147483648
        %v471 = vmul.f32 %v469, 1.442695
        %v472 = vpow.pop %v471
        %v473 = vmul.f32 %v470, 1.442695
        %v474 = vpow.pop %v473
        %v475 = vadd.f32 %v472, 1.0
        %v476 = vadd.f32 %v474, 1.0
        %v477 = vrcp.pop %v475
        %v478 = vmul.f32 1.0, %v477
        %v479 = vrcp.pop %v476
        %v480 = vmul.f32 1.0, %v479
        %481 = vmatprep.subr.mxu0 0.0
        %482 = vmatpush1.msra.mxu0 %v478
        %483 = vmatprep.subr.mxu0 0.0
        %484 = vmatpush1.msra.mxu0 %v480
        %485 = vmatprep.subr.mxu0 0.0
        %486 = vmatpush1.msra.mxu0 0.0
        %487 = vmatprep.subr.mxu0 0.0
        %488 = vmatpush1.msra.mxu0 0.0
        %489 = vmatprep.subr.mxu0 0.0
        %490 = vmatpush1.msra.mxu0 0.0
        %491 = vmatprep.subr.mxu0 0.0
        %492 = vmatpush1.msra.mxu0 0.0
        %493 = vmatprep.subr.mxu0 0.0
        %494 = vmatpush1.msra.mxu0 0.0
        %495 = vmatprep.subr.mxu0 0.0
        %496 = vmatpush1.msra.mxu0 0.0
        %497 = vmatprep.subr.mxu0 0.0
        %498 = vmatpush1.msra.mxu0 0.0
        %499 = vmatprep.subr.mxu0 0.0
        %500 = vmatpush1.msra.mxu0 0.0
        %501 = vmatprep.subr.mxu0 0.0
        %502 = vmatpush1.msra.mxu0 0.0
        %503 = vmatprep.subr.mxu0 0.0
        %504 = vmatpush1.msra.mxu0 0.0
        %505 = vmatprep.subr.mxu0 0.0
        %506 = vmatpush1.msra.mxu0 0.0
        %507 = vmatprep.subr.mxu0 0.0
        %508 = vmatpush1.msra.mxu0 0.0
        %509 = vmatprep.subr.mxu0 0.0
        %510 = vmatpush1.msra.mxu0 0.0
        %511 = vmatprep.subr.mxu0 0.0
        %512 = vmatpush1.msra.mxu0 0.0
        %513 = vmatprep.subr.mxu0 0.0
        %514 = vmatpush1.msra.mxu0 0.0
        %515 = vmatprep.subr.mxu0 0.0
        %516 = vmatpush1.msra.mxu0 0.0
        %517 = vmatprep.subr.mxu0 0.0
        %518 = vmatpush1.msra.mxu0 0.0
        %519 = vmatprep.subr.mxu0 0.0
        %520 = vmatpush1.msra.mxu0 0.0
        %521 = vmatprep.subr.mxu0 0.0
        %522 = vmatpush1.msra.mxu0 0.0
        %523 = vmatprep.subr.mxu0 0.0
        %524 = vmatpush1.msra.mxu0 0.0
        %525 = vmatprep.subr.mxu0 0.0
        %526 = vmatpush1.msra.mxu0 0.0
        %527 = vmatprep.subr.mxu0 0.0
        %528 = vmatpush1.msra.mxu0 0.0
        %529 = vmatprep.subr.mxu0 0.0
        %530 = vmatpush1.msra.mxu0 0.0
        %531 = vmatprep.subr.mxu0 0.0
        %532 = vmatpush1.msra.mxu0 0.0
        %533 = vmatprep.subr.mxu0 0.0
        %534 = vmatpush1.msra.mxu0 0.0
        %535 = vmatprep.subr.mxu0 0.0
        %536 = vmatpush1.msra.mxu0 0.0
        %537 = vmatprep.subr.mxu0 0.0
        %538 = vmatpush1.msra.mxu0 0.0
        %539 = vmatprep.subr.mxu0 0.0
        %540 = vmatpush1.msra.mxu0 0.0
        %541 = vmatprep.subr.mxu0 0.0
        %542 = vmatpush1.msra.mxu0 0.0
        %543 = vmatprep.subr.mxu0 0.0
        %544 = vmatpush1.msra.mxu0 0.0
        %545 = vmatprep.mubr.f32.mxu0 0.0
        %546 = vmatmul.mubr.f32.gmra.mrb[0].mxu0 %v300
        %v547 = vpop.f32.mrb[0].mxu0
        %v548 = vadd.f32 0.0, %v547
        %v549 = vpop.f32.mrb[0].mxu0
        %550 = vmatprep.mubr.f32.mxu0 0.0
        %551 = vmatmul.mubr.f32.gmra.mrb[0].mxu0 %v303
        %v552 = vpop.f32.mrb[0].mxu0
        %v553 = vadd.f32 0.0, %v552
        %v554 = vpop.f32.mrb[0].mxu0
        %555 = vdwg.mxu0
        %v557 = vsel %vm298, %v548, 0
        %v560 = vsel %vm298, %v553, 0
        %562 = vmatprep.subr.mxu0 0.0
        %563 = vmatpush1.msra.mxu0 %v282
        %564 = vmatprep.subr.mxu0 0.0
        %565 = vmatpush1.msra.mxu0 %v283
        %566 = vmatprep.subr.mxu0 0.0
        %567 = vmatpush1.msra.mxu0 0.0
        %568 = vmatprep.subr.mxu0 0.0
        %569 = vmatpush1.msra.mxu0 0.0
        %570 = vmatprep.subr.mxu0 0.0
        %571 = vmatpush1.msra.mxu0 0.0
        %572 = vmatprep.subr.mxu0 0.0
        %573 = vmatpush1.msra.mxu0 0.0
        %574 = vmatprep.subr.mxu0 0.0
        %575 = vmatpush1.msra.mxu0 0.0
        %576 = vmatprep.subr.mxu0 0.0
        %577 = vmatpush1.msra.mxu0 0.0
        %578 = vmatprep.subr.mxu0 0.0
        %579 = vmatpush1.msra.mxu0 0.0
        %580 = vmatprep.subr.mxu0 0.0
        %581 = vmatpush1.msra.mxu0 0.0
        %582 = vmatprep.subr.mxu0 0.0
        %583 = vmatpush1.msra.mxu0 0.0
        %584 = vmatprep.subr.mxu0 0.0
        %585 = vmatpush1.msra.mxu0 0.0
        %586 = vmatprep.subr.mxu0 0.0
        %587 = vmatpush1.msra.mxu0 0.0
        %588 = vmatprep.subr.mxu0 0.0
        %589 = vmatpush1.msra.mxu0 0.0
        %590 = vmatprep.subr.mxu0 0.0
        %591 = vmatpush1.msra.mxu0 0.0
        %592 = vmatprep.subr.mxu0 0.0
        %593 = vmatpush1.msra.mxu0 0.0
        %594 = vmatprep.subr.mxu0 0.0
        %595 = vmatpush1.msra.mxu0 0.0
        %596 = vmatprep.subr.mxu0 0.0
        %597 = vmatpush1.msra.mxu0 0.0
        %598 = vmatprep.subr.mxu0 0.0
        %599 = vmatpush1.msra.mxu0 0.0
        %600 = vmatprep.subr.mxu0 0.0
        %601 = vmatpush1.msra.mxu0 0.0
        %602 = vmatprep.subr.mxu0 0.0
        %603 = vmatpush1.msra.mxu0 0.0
        %604 = vmatprep.subr.mxu0 0.0
        %605 = vmatpush1.msra.mxu0 0.0
        %606 = vmatprep.subr.mxu0 0.0
        %607 = vmatpush1.msra.mxu0 0.0
        %608 = vmatprep.subr.mxu0 0.0
        %609 = vmatpush1.msra.mxu0 0.0
        %610 = vmatprep.subr.mxu0 0.0
        %611 = vmatpush1.msra.mxu0 0.0
        %612 = vmatprep.subr.mxu0 0.0
        %613 = vmatpush1.msra.mxu0 0.0
        %614 = vmatprep.subr.mxu0 0.0
        %615 = vmatpush1.msra.mxu0 0.0
        %616 = vmatprep.subr.mxu0 0.0
        %617 = vmatpush1.msra.mxu0 0.0
        %618 = vmatprep.subr.mxu0 0.0
        %619 = vmatpush1.msra.mxu0 0.0
        %620 = vmatprep.subr.mxu0 0.0
        %621 = vmatpush1.msra.mxu0 0.0
        %622 = vmatprep.subr.mxu0 0.0
        %623 = vmatpush1.msra.mxu0 0.0
        %624 = vmatprep.subr.mxu0 0.0
        %625 = vmatpush1.msra.mxu0 0.0
        %626 = vmatprep.mubr.f32.mxu0 0.0
        %627 = vmatmul.mubr.f32.gmra.mrb[0].mxu0 %v557
        %v628 = vpop.f32.mrb[0].mxu0
        %v629 = vadd.f32 0.0, %v628
        %v630 = vpop.f32.mrb[0].mxu0
        %631 = vmatprep.mubr.f32.mxu0 0.0
        %632 = vmatmul.mubr.f32.gmra.mrb[0].mxu0 %v560
        %v633 = vpop.f32.mrb[0].mxu0
        %v634 = vadd.f32 0.0, %v633
        %v635 = vpop.f32.mrb[0].mxu0
        %636 = vdwg.mxu0
        %vm637 = vcmp.gt.f32.partialorder %v629, 0.5
        %vm638 = vcmp.gt.f32.partialorder %v634, 0.5
        %v639 = vsel %vm637, 1.0, 0.0
        %v640 = vsel %vm638, 1.0, 0.0
        %s641 = scalar_lea.vmem %s279, 16 [#allocation9]
        %642 = vst.msk [vmem:[%s641] sm:$0xff] %vm298, %v639
        %643 = vst.msk [vmem:[%s641 + $0x8] sm:$0xff] %vm298, %v640
        %s644 = scalar_lea.vmem %s250, 16 [#allocation8]
        %v645 = vld [vmem:[%s644] sm:$0xff]
        %v646 = vld [vmem:[%s644 + $0x8] sm:$0xff]
        %v647 = vxor.u32 %v645, 2147483648
        %v648 = vxor.u32 %v646, 2147483648
        %v649 = vmul.f32 %v647, 1.442695
        %v650 = vpow.pop %v649
        %v651 = vmul.f32 %v648, 1.442695
        %v652 = vpow.pop %v651
        %v653 = vadd.f32 %v650, 1.0
        %v654 = vadd.f32 %v652, 1.0
        %v655 = vrcp.pop %v653
        %v656 = vmul.f32 1.0, %v655
        %v657 = vrcp.pop %v654
        %v658 = vmul.f32 1.0, %v657
        %659 = vmatprep.subr.mxu0 0.0
        %660 = vmatpush1.msra.mxu0 %v656
        %661 = vmatprep.subr.mxu0 0.0
        %662 = vmatpush1.msra.mxu0 %v658
        %663 = vmatprep.subr.mxu0 0.0
        %664 = vmatpush1.msra.mxu0 0.0
        %665 = vmatprep.subr.mxu0 0.0
        %666 = vmatpush1.msra.mxu0 0.0
        %667 = vmatprep.subr.mxu0 0.0
        %668 = vmatpush1.msra.mxu0 0.0
        %669 = vmatprep.subr.mxu0 0.0
        %670 = vmatpush1.msra.mxu0 0.0
        %671 = vmatprep.subr.mxu0 0.0
        %672 = vmatpush1.msra.mxu0 0.0
        %673 = vmatprep.subr.mxu0 0.0
        %674 = vmatpush1.msra.mxu0 0.0
        %675 = vmatprep.subr.mxu0 0.0
        %676 = vmatpush1.msra.mxu0 0.0
        %677 = vmatprep.subr.mxu0 0.0
        %678 = vmatpush1.msra.mxu0 0.0
        %679 = vmatprep.subr.mxu0 0.0
        %680 = vmatpush1.msra.mxu0 0.0
        %681 = vmatprep.subr.mxu0 0.0
        %682 = vmatpush1.msra.mxu0 0.0
        %683 = vmatprep.subr.mxu0 0.0
        %684 = vmatpush1.msra.mxu0 0.0
        %685 = vmatprep.subr.mxu0 0.0
        %686 = vmatpush1.msra.mxu0 0.0
        %687 = vmatprep.subr.mxu0 0.0
        %688 = vmatpush1.msra.mxu0 0.0
        %689 = vmatprep.subr.mxu0 0.0
        %690 = vmatpush1.msra.mxu0 0.0
        %691 = vmatprep.subr.mxu0 0.0
        %692 = vmatpush1.msra.mxu0 0.0
        %693 = vmatprep.subr.mxu0 0.0
        %694 = vmatpush1.msra.mxu0 0.0
        %695 = vmatprep.subr.mxu0 0.0
        %696 = vmatpush1.msra.mxu0 0.0
        %697 = vmatprep.subr.mxu0 0.0
        %698 = vmatpush1.msra.mxu0 0.0
        %699 = vmatprep.subr.mxu0 0.0
        %700 = vmatpush1.msra.mxu0 0.0
        %701 = vmatprep.subr.mxu0 0.0
        %702 = vmatpush1.msra.mxu0 0.0
        %703 = vmatprep.subr.mxu0 0.0
        %704 = vmatpush1.msra.mxu0 0.0
        %705 = vmatprep.subr.mxu0 0.0
        %706 = vmatpush1.msra.mxu0 0.0
        %707 = vmatprep.subr.mxu0 0.0
        %708 = vmatpush1.msra.mxu0 0.0
        %709 = vmatprep.subr.mxu0 0.0
        %710 = vmatpush1.msra.mxu0 0.0
        %711 = vmatprep.subr.mxu0 0.0
        %712 = vmatpush1.msra.mxu0 0.0
        %713 = vmatprep.subr.mxu0 0.0
        %714 = vmatpush1.msra.mxu0 0.0
        %715 = vmatprep.subr.mxu0 0.0
        %716 = vmatpush1.msra.mxu0 0.0
        %717 = vmatprep.subr.mxu0 0.0
        %718 = vmatpush1.msra.mxu0 0.0
        %719 = vmatprep.subr.mxu0 0.0
        %720 = vmatpush1.msra.mxu0 0.0
        %721 = vmatprep.subr.mxu0 0.0
        %722 = vmatpush1.msra.mxu0 0.0
        %723 = vmatprep.mubr.f32.mxu0 0.0
        %724 = vmatmul.mubr.f32.gmra.mrb[0].mxu0 %v300
        %v725 = vpop.f32.mrb[0].mxu0
        %v726 = vadd.f32 0.0, %v725
        %v727 = vpop.f32.mrb[0].mxu0
        %728 = vmatprep.mubr.f32.mxu0 0.0
        %729 = vmatmul.mubr.f32.gmra.mrb[0].mxu0 %v303
        %v730 = vpop.f32.mrb[0].mxu0
        %v731 = vadd.f32 0.0, %v730
        %v732 = vpop.f32.mrb[0].mxu0
        %733 = vdwg.mxu0
        %v735 = vsel %vm298, %v726, 0
        %v738 = vsel %vm298, %v731, 0
        %740 = vmatprep.subr.mxu0 0.0
        %741 = vmatpush1.msra.mxu0 %v282
        %742 = vmatprep.subr.mxu0 0.0
        %743 = vmatpush1.msra.mxu0 %v283
        %744 = vmatprep.subr.mxu0 0.0
        %745 = vmatpush1.msra.mxu0 0.0
        %746 = vmatprep.subr.mxu0 0.0
        %747 = vmatpush1.msra.mxu0 0.0
        %748 = vmatprep.subr.mxu0 0.0
        %749 = vmatpush1.msra.mxu0 0.0
        %750 = vmatprep.subr.mxu0 0.0
        %751 = vmatpush1.msra.mxu0 0.0
        %752 = vmatprep.subr.mxu0 0.0
        %753 = vmatpush1.msra.mxu0 0.0
        %754 = vmatprep.subr.mxu0 0.0
        %755 = vmatpush1.msra.mxu0 0.0
        %756 = vmatprep.subr.mxu0 0.0
        %757 = vmatpush1.msra.mxu0 0.0
        %758 = vmatprep.subr.mxu0 0.0
        %759 = vmatpush1.msra.mxu0 0.0
        %760 = vmatprep.subr.mxu0 0.0
        %761 = vmatpush1.msra.mxu0 0.0
        %762 = vmatprep.subr.mxu0 0.0
        %763 = vmatpush1.msra.mxu0 0.0
        %764 = vmatprep.subr.mxu0 0.0
        %765 = vmatpush1.msra.mxu0 0.0
        %766 = vmatprep.subr.mxu0 0.0
        %767 = vmatpush1.msra.mxu0 0.0
        %768 = vmatprep.subr.mxu0 0.0
        %769 = vmatpush1.msra.mxu0 0.0
        %770 = vmatprep.subr.mxu0 0.0
        %771 = vmatpush1.msra.mxu0 0.0
        %772 = vmatprep.subr.mxu0 0.0
        %773 = vmatpush1.msra.mxu0 0.0
        %774 = vmatprep.subr.mxu0 0.0
        %775 = vmatpush1.msra.mxu0 0.0
        %776 = vmatprep.subr.mxu0 0.0
        %777 = vmatpush1.msra.mxu0 0.0
        %778 = vmatprep.subr.mxu0 0.0
        %779 = vmatpush1.msra.mxu0 0.0
        %780 = vmatprep.subr.mxu0 0.0
        %781 = vmatpush1.msra.mxu0 0.0
        %782 = vmatprep.subr.mxu0 0.0
        %783 = vmatpush1.msra.mxu0 0.0
        %784 = vmatprep.subr.mxu0 0.0
        %785 = vmatpush1.msra.mxu0 0.0
        %786 = vmatprep.subr.mxu0 0.0
        %787 = vmatpush1.msra.mxu0 0.0
        %788 = vmatprep.subr.mxu0 0.0
        %789 = vmatpush1.msra.mxu0 0.0
        %790 = vmatprep.subr.mxu0 0.0
        %791 = vmatpush1.msra.mxu0 0.0
        %792 = vmatprep.subr.mxu0 0.0
        %793 = vmatpush1.msra.mxu0 0.0
        %794 = vmatprep.subr.mxu0 0.0
        %795 = vmatpush1.msra.mxu0 0.0
        %796 = vmatprep.subr.mxu0 0.0
        %797 = vmatpush1.msra.mxu0 0.0
        %798 = vmatprep.subr.mxu0 0.0
        %799 = vmatpush1.msra.mxu0 0.0
        %800 = vmatprep.subr.mxu0 0.0
        %801 = vmatpush1.msra.mxu0 0.0
        %802 = vmatprep.subr.mxu0 0.0
        %803 = vmatpush1.msra.mxu0 0.0
        %804 = vmatprep.mubr.f32.mxu0 0.0
        %805 = vmatmul.mubr.f32.gmra.mrb[0].mxu0 %v735
        %v806 = vpop.f32.mrb[0].mxu0
        %v807 = vadd.f32 0.0, %v806
        %v808 = vpop.f32.mrb[0].mxu0
        %809 = vmatprep.mubr.f32.mxu0 0.0
        %810 = vmatmul.mubr.f32.gmra.mrb[0].mxu0 %v738
        %v811 = vpop.f32.mrb[0].mxu0
        %v812 = vadd.f32 0.0, %v811
        %v813 = vpop.f32.mrb[0].mxu0
        %814 = vdwg.mxu0
        %vm815 = vcmp.gt.f32.partialorder %v807, 0.5
        %vm816 = vcmp.gt.f32.partialorder %v812, 0.5
        %v817 = vsel %vm815, 1.0, 0.0
        %v818 = vsel %vm816, 1.0, 0.0
        %s819 = scalar_lea.vmem %s279, 32 [#allocation9]
        %820 = vst.msk [vmem:[%s819] sm:$0xff] %vm298, %v817
        %821 = vst.msk [vmem:[%s819 + $0x8] sm:$0xff] %vm298, %v818
        %s822 = scalar_lea.vmem %s250, 32 [#allocation8]
        %v823 = vld [vmem:[%s822] sm:$0xff]
        %v824 = vld [vmem:[%s822 + $0x8] sm:$0xff]
        %v825 = vxor.u32 %v823, 2147483648
        %v826 = vxor.u32 %v824, 2147483648
        %v827 = vmul.f32 %v825, 1.442695
        %v828 = vpow.pop %v827
        %v829 = vmul.f32 %v826, 1.442695
        %v830 = vpow.pop %v829
        %v831 = vadd.f32 %v828, 1.0
        %v832 = vadd.f32 %v830, 1.0
        %v833 = vrcp.pop %v831
        %v834 = vmul.f32 1.0, %v833
        %v835 = vrcp.pop %v832
        %v836 = vmul.f32 1.0, %v835
        %837 = vmatprep.subr.mxu0 0.0
        %838 = vmatpush1.msra.mxu0 %v834
        %839 = vmatprep.subr.mxu0 0.0
        %840 = vmatpush1.msra.mxu0 %v836
        %841 = vmatprep.subr.mxu0 0.0
        %842 = vmatpush1.msra.mxu0 0.0
        %843 = vmatprep.subr.mxu0 0.0
        %844 = vmatpush1.msra.mxu0 0.0
        %845 = vmatprep.subr.mxu0 0.0
        %846 = vmatpush1.msra.mxu0 0.0
        %847 = vmatprep.subr.mxu0 0.0
        %848 = vmatpush1.msra.mxu0 0.0
        %849 = vmatprep.subr.mxu0 0.0
        %850 = vmatpush1.msra.mxu0 0.0
        %851 = vmatprep.subr.mxu0 0.0
        %852 = vmatpush1.msra.mxu0 0.0
        %853 = vmatprep.subr.mxu0 0.0
        %854 = vmatpush1.msra.mxu0 0.0
        %855 = vmatprep.subr.mxu0 0.0
        %856 = vmatpush1.msra.mxu0 0.0
        %857 = vmatprep.subr.mxu0 0.0
        %858 = vmatpush1.msra.mxu0 0.0
        %859 = vmatprep.subr.mxu0 0.0
        %860 = vmatpush1.msra.mxu0 0.0
        %861 = vmatprep.subr.mxu0 0.0
        %862 = vmatpush1.msra.mxu0 0.0
        %863 = vmatprep.subr.mxu0 0.0
        %864 = vmatpush1.msra.mxu0 0.0
        %865 = vmatprep.subr.mxu0 0.0
        %866 = vmatpush1.msra.mxu0 0.0
        %867 = vmatprep.subr.mxu0 0.0
        %868 = vmatpush1.msra.mxu0 0.0
        %869 = vmatprep.subr.mxu0 0.0
        %870 = vmatpush1.msra.mxu0 0.0
        %871 = vmatprep.subr.mxu0 0.0
        %872 = vmatpush1.msra.mxu0 0.0
        %873 = vmatprep.subr.mxu0 0.0
        %874 = vmatpush1.msra.mxu0 0.0
        %875 = vmatprep.subr.mxu0 0.0
        %876 = vmatpush1.msra.mxu0 0.0
        %877 = vmatprep.subr.mxu0 0.0
        %878 = vmatpush1.msra.mxu0 0.0
        %879 = vmatprep.subr.mxu0 0.0
        %880 = vmatpush1.msra.mxu0 0.0
        %881 = vmatprep.subr.mxu0 0.0
        %882 = vmatpush1.msra.mxu0 0.0
        %883 = vmatprep.subr.mxu0 0.0
        %884 = vmatpush1.msra.mxu0 0.0
        %885 = vmatprep.subr.mxu0 0.0
        %886 = vmatpush1.msra.mxu0 0.0
        %887 = vmatprep.subr.mxu0 0.0
        %888 = vmatpush1.msra.mxu0 0.0
        %889 = vmatprep.subr.mxu0 0.0
        %890 = vmatpush1.msra.mxu0 0.0
        %891 = vmatprep.subr.mxu0 0.0
        %892 = vmatpush1.msra.mxu0 0.0
        %893 = vmatprep.subr.mxu0 0.0
        %894 = vmatpush1.msra.mxu0 0.0
        %895 = vmatprep.subr.mxu0 0.0
        %896 = vmatpush1.msra.mxu0 0.0
        %897 = vmatprep.subr.mxu0 0.0
        %898 = vmatpush1.msra.mxu0 0.0
        %899 = vmatprep.subr.mxu0 0.0
        %900 = vmatpush1.msra.mxu0 0.0
        %901 = vmatprep.mubr.f32.mxu0 0.0
        %902 = vmatmul.mubr.f32.gmra.mrb[0].mxu0 %v300
        %v903 = vpop.f32.mrb[0].mxu0
        %v904 = vadd.f32 0.0, %v903
        %v905 = vpop.f32.mrb[0].mxu0
        %906 = vmatprep.mubr.f32.mxu0 0.0
        %907 = vmatmul.mubr.f32.gmra.mrb[0].mxu0 %v303
        %v908 = vpop.f32.mrb[0].mxu0
        %v909 = vadd.f32 0.0, %v908
        %v910 = vpop.f32.mrb[0].mxu0
        %911 = vdwg.mxu0
        %v913 = vsel %vm298, %v904, 0
        %v916 = vsel %vm298, %v909, 0
        %918 = vmatprep.subr.mxu0 0.0
        %919 = vmatpush1.msra.mxu0 %v282
        %920 = vmatprep.subr.mxu0 0.0
        %921 = vmatpush1.msra.mxu0 %v283
        %922 = vmatprep.subr.mxu0 0.0
        %923 = vmatpush1.msra.mxu0 0.0
        %924 = vmatprep.subr.mxu0 0.0
        %925 = vmatpush1.msra.mxu0 0.0
        %926 = vmatprep.subr.mxu0 0.0
        %927 = vmatpush1.msra.mxu0 0.0
        %928 = vmatprep.subr.mxu0 0.0
        %929 = vmatpush1.msra.mxu0 0.0
        %930 = vmatprep.subr.mxu0 0.0
        %931 = vmatpush1.msra.mxu0 0.0
        %932 = vmatprep.subr.mxu0 0.0
        %933 = vmatpush1.msra.mxu0 0.0
        %934 = vmatprep.subr.mxu0 0.0
        %935 = vmatpush1.msra.mxu0 0.0
        %936 = vmatprep.subr.mxu0 0.0
        %937 = vmatpush1.msra.mxu0 0.0
        %938 = vmatprep.subr.mxu0 0.0
        %939 = vmatpush1.msra.mxu0 0.0
        %940 = vmatprep.subr.mxu0 0.0
        %941 = vmatpush1.msra.mxu0 0.0
        %942 = vmatprep.subr.mxu0 0.0
        %943 = vmatpush1.msra.mxu0 0.0
        %944 = vmatprep.subr.mxu0 0.0
        %945 = vmatpush1.msra.mxu0 0.0
        %946 = vmatprep.subr.mxu0 0.0
        %947 = vmatpush1.msra.mxu0 0.0
        %948 = vmatprep.subr.mxu0 0.0
        %949 = vmatpush1.msra.mxu0 0.0
        %950 = vmatprep.subr.mxu0 0.0
        %951 = vmatpush1.msra.mxu0 0.0
        %952 = vmatprep.subr.mxu0 0.0
        %953 = vmatpush1.msra.mxu0 0.0
        %954 = vmatprep.subr.mxu0 0.0
        %955 = vmatpush1.msra.mxu0 0.0
        %956 = vmatprep.subr.mxu0 0.0
        %957 = vmatpush1.msra.mxu0 0.0
        %958 = vmatprep.subr.mxu0 0.0
        %959 = vmatpush1.msra.mxu0 0.0
        %960 = vmatprep.subr.mxu0 0.0
        %961 = vmatpush1.msra.mxu0 0.0
        %962 = vmatprep.subr.mxu0 0.0
        %963 = vmatpush1.msra.mxu0 0.0
        %964 = vmatprep.subr.mxu0 0.0
        %965 = vmatpush1.msra.mxu0 0.0
        %966 = vmatprep.subr.mxu0 0.0
        %967 = vmatpush1.msra.mxu0 0.0
        %968 = vmatprep.subr.mxu0 0.0
        %969 = vmatpush1.msra.mxu0 0.0
        %970 = vmatprep.subr.mxu0 0.0
        %971 = vmatpush1.msra.mxu0 0.0
        %972 = vmatprep.subr.mxu0 0.0
        %973 = vmatpush1.msra.mxu0 0.0
        %974 = vmatprep.subr.mxu0 0.0
        %975 = vmatpush1.msra.mxu0 0.0
        %976 = vmatprep.subr.mxu0 0.0
        %977 = vmatpush1.msra.mxu0 0.0
        %978 = vmatprep.subr.mxu0 0.0
        %979 = vmatpush1.msra.mxu0 0.0
        %980 = vmatprep.subr.mxu0 0.0
        %981 = vmatpush1.msra.mxu0 0.0
        %982 = vmatprep.mubr.f32.mxu0 0.0
        %983 = vmatmul.mubr.f32.gmra.mrb[0].mxu0 %v913
        %v984 = vpop.f32.mrb[0].mxu0
        %v985 = vadd.f32 0.0, %v984
        %v986 = vpop.f32.mrb[0].mxu0
        %987 = vmatprep.mubr.f32.mxu0 0.0
        %988 = vmatmul.mubr.f32.gmra.mrb[0].mxu0 %v916
        %v989 = vpop.f32.mrb[0].mxu0
        %v990 = vadd.f32 0.0, %v989
        %v991 = vpop.f32.mrb[0].mxu0
        %992 = vdwg.mxu0
        %vm993 = vcmp.gt.f32.partialorder %v985, 0.5
        %vm994 = vcmp.gt.f32.partialorder %v990, 0.5
        %v995 = vsel %vm993, 1.0, 0.0
        %v996 = vsel %vm994, 1.0, 0.0
        %s997 = scalar_lea.vmem %s279, 48 [#allocation9]
        %998 = vst.msk [vmem:[%s997] sm:$0xff] %vm298, %v995
        %999 = vst.msk [vmem:[%s997 + $0x8] sm:$0xff] %vm298, %v996
        %s1000 = sand.u32 %s122, 1
        %s1001 = scalar_lea.sflag [#allocation4], %s1000
        %s1002 = sand.u32 %s122, 1
        %s1003 = smul.addr %s1002, 64
        %s1004 = scalar_lea.vmem [#allocation9], %s1003
        // Predicated region
        $region53: #{tpu_custom_call.1} parent=35 // pred_check
          %p1005 = pneg %p132
        $region54: #{tpu_custom_call.1} parent=35 // pred_check_branch
          %1007 = sbr.rel (%p1005) target = $region56
        $region55: #{tpu_custom_call.1} parent=35 // pred_region
          %s1009 = ssub.s32 1024, 1024
          %1010 = vsyncadd %s1001, %s1009
          %s1011 = smul.addr %s20, 8
          %s1012 = smul.addr %s1011, 128
          %s1013 = scalar_lea.hbm %s4, %s1012
          %s1014 = sshll.u32 %s1004, 4
          %s1015 = int_to_ptr.vmem [resolvable:$true] %s1014
          %1020 = dma.vmem_to_hbm [thread:$0]  %s1015, 1024, %s1013, %s1001, 128, 128, 8
        $region56: #{tpu_custom_call.1} parent=35 // pred_fallthru
          _
      $region36: #{tpu_custom_call.1} parent=5 // pred_fallthru
        _
      %p1021 = scmp.le.s32.totalorder 2, %s15
      // Predicated region
      $region57: #{tpu_custom_call.1} parent=5 // pred_check
        %p1022 = pneg %p1021
      $region58: #{tpu_custom_call.1} parent=5 // pred_check_branch
        %1024 = sbr.rel (%p1022) target = $region60
      $region59: #{tpu_custom_call.1} parent=5 // pred_region
        %s1025 = ssub.s32 %s15, 2
        // Predicated region
        $region61: #{tpu_custom_call.1} parent=59 // pred_check
          %p1026 = pneg %p138
        $region62: #{tpu_custom_call.1} parent=59 // pred_check_branch
          %1028 = sbr.rel (%p1026) target = $region64
        $region63: #{tpu_custom_call.1} parent=59 // pred_region
          %s1029 = sand.u32 %s123, 1
          %s1030 = scalar_lea.sflag [#allocation4], %s1029
          %s1031 = sand.u32 %s123, 1
          %s1032 = smul.addr %s1031, 64
          %s1033 = scalar_lea.vmem [#allocation9], %s1032
          %1034 = dma.done %s1030, 1024
        $region64: #{tpu_custom_call.1} parent=59 // pred_fallthru
          _
      $region60: #{tpu_custom_call.1} parent=5 // pred_fallthru
        _
    $region6: #{tpu_custom_call.1} parent=1 // loop_footer
      %s19 = sadd.s32 1, %s15
    $region7: #{tpu_custom_call.1} parent=1 // loop_footer_branch
      %14 = sbr.rel target = $region3
    $region8: #{tpu_custom_call.1} parent=1 // loop_exit
      _
    %1035 = vsyncpa [#allocation3], 1
    %s1036 = scalar_lea.sflag [#allocation3], 1
    %1037 = vsyncpa %s1036, 1
    %1038 = vsyncpa [#allocation6], 1
    %1039 = vsyncpa [#allocation4], 1
    %s1040 = scalar_lea.sflag [#allocation4], 1
    %1041 = vsyncpa %s1040, 1

</llo_original>
